<compile_context>
chip_gen: v5e
topology: v5e:2x2
jax: 0.10.0
libtpu: 0.0.40
codegen_flags: <defaults>
</compile_context>

<pallas_src>
import functools

import jax
import jax.numpy as jnp
import numpy as np
from jax.experimental import pallas as pl
from jax.experimental.pallas import tpu as pltpu


def _round_up(n, m):
    return (n + m - 1) // m * m


def _kacn_kernel(x_ref, *rest, degree: int):
    """Fused KACN forward for one batch tile.

    rest = (w_flat_layer0, ..., w_flat_layerL-1, out_ref), where each weight
    is the layer's cheby_coeffs reshaped to [(degree+1)*D_in_pad, D_out_pad]
    (degree-major rows, bf16) with zero rows/columns for padded inputs/outputs.
    """
    o_ref = rest[-1]
    w_refs = rest[:-1]

    h = x_ref[...]
    if h.dtype != jnp.float32:
        h = h.astype(jnp.float32)          # elementwise math stays f32 (v5e)

    for w_ref in w_refs:
        t = jnp.tanh(h)                    # the only EUP op per layer
        # Chebyshev polynomials T_0..T_degree via the VPU recurrence
        # (== cos(d * arccos(t)) for t in [-1, 1]).
        cheb = [jnp.ones_like(t)]
        if degree >= 1:
            cheb.append(t)
            t2 = t + t                     # hoisted: T_{d+1} = t2*T_d - T_{d-1}
            for _ in range(2, degree + 1):
                cheb.append(t2 * cheb[-1] - cheb[-2])
        # Lane-concatenate degree-major: every block is a 128-multiple wide,
        # so the concat is layout-free.  Column index = d * D_pad + i.
        feats = cheb[0] if degree == 0 else jnp.concatenate(cheb, axis=-1)
        # Single MXU contraction, bf16 inputs, f32 accumulation.
        h = jnp.dot(feats.astype(w_ref.dtype), w_ref[...],
                    preferred_element_type=jnp.float32)

    o_ref[...] = h.astype(o_ref.dtype)


def _prep_weight(c, din_pad, dout_pad, dtype):
    """[D_in, D_out, deg+1] -> [(deg+1)*D_in_pad, D_out_pad] degree-major rows.

    Padding is applied per degree block BEFORE flattening, so weight rows for
    zero-padded input columns are zero in every degree block (T_0(0)=1 must
    not contribute), and padded output columns are all-zero.
    """
    din, dout, dp1 = c.shape
    w = jnp.transpose(c, (2, 0, 1))                          # [deg+1, din, dout]
    w = jnp.pad(w, ((0, 0), (0, din_pad - din), (0, dout_pad - dout)))
    return w.reshape(dp1 * din_pad, dout_pad).astype(dtype)


def _pick_batch_tile(B, block_b):
    """Pad-aware batch tile: tb ~= cdiv(B, n_tiles) rounded to 8, with
    n_tiles >= 2 whenever the batch permits (so v7x's 2 TCs both get work)."""
    n_tiles = max(pl.cdiv(B, block_b), 1)
    if n_tiles < 2 and B > 8:
        n_tiles = 2
    return _round_up(pl.cdiv(B, n_tiles), 8)


def kacn_forward(x, cheby_coeffs, degree, *, block_b=1024,
                 weight_dtype=jnp.bfloat16):
    """Run the fused KACN network. cheby_coeffs[l] has shape (D_in, D_out, degree+1)."""
    orig_dtype = x.dtype
    B, d_in0 = x.shape
    out_dim = cheby_coeffs[-1].shape[1]
    assert cheby_coeffs[0].shape[0] == d_in0

    # Pad every layer width (input & output) to a multiple of 128 lanes.
    dims = [c.shape[0] for c in cheby_coeffs] + [out_dim]
    d_pads = [_round_up(d, 128) for d in dims]

    # Host-side layout plumbing; weights stored bf16 (MXU-native, half bytes).
    w_flat = [_prep_weight(c, d_pads[l], d_pads[l + 1], weight_dtype)
              for l, c in enumerate(cheby_coeffs)]

    # Batch tiling: rows are pipelined through the grid; weights stay resident.
    tb = _pick_batch_tile(B, block_b)
    bp = _round_up(B, tb)
    grid = (bp // tb,)

    # Pad input: zero rows for the batch pad, zero columns for the lane pad
    # (the matching weight rows are zero in every degree block).
    x = jnp.pad(x, ((0, bp - B), (0, d_pads[0] - d_in0)))

    in_specs = [pl.BlockSpec((tb, d_pads[0]), lambda i: (i, 0))]
    for w in w_flat:
        in_specs.append(pl.BlockSpec(w.shape, lambda i: (0, 0)))
    out_specs = pl.BlockSpec((tb, d_pads[-1]), lambda i: (i, 0))

    # Explicit scoped-VMEM budget with headroom (v5e default is only 16 MiB).
    itemsize_out = jnp.dtype(orig_dtype).itemsize
    bytes_w = sum(w.size * w.dtype.itemsize for w in w_flat)
    bytes_io = tb * d_pads[0] * x.dtype.itemsize + tb * d_pads[-1] * itemsize_out
    bytes_work = max(tb * (degree + 1) * din_p * 6 + tb * dout_p * 4
                     for din_p, dout_p in zip(d_pads[:-1], d_pads[1:]))
    est = 2 * (bytes_w + bytes_io) + bytes_work
    vmem_limit = int(min(max(2 * est, 32 * 2**20), 64 * 2**20))

    kernel = functools.partial(_kacn_kernel, degree=degree)
    out = pl.pallas_call(
        kernel,
        out_shape=jax.ShapeDtypeStruct((bp, d_pads[-1]), orig_dtype),
        grid=grid,
        in_specs=in_specs,
        out_specs=out_specs,
        compiler_params=pltpu.CompilerParams(
            dimension_semantics=("parallel",),   # v7x: split batch over 2 TCs
            vmem_limit_bytes=vmem_limit,
        ),
    )(x, *w_flat)

    return out[:B, :out_dim]


def init_kacn_params(key, layers_hidden, degree):
    """Synthetic parameters mirroring ChebyKANLayer: cheby_coeffs ~ N(0, 1/(D_in*(deg+1)))."""
    coeffs = []
    for din, dout in zip(layers_hidden[:-1], layers_hidden[1:]):
        key, k = jax.random.split(key)
        std = 1.0 / (din * (degree + 1))
        coeffs.append(std * jax.random.normal(k, (din, dout, degree + 1), jnp.float32))
    return coeffs


def kacn_reference(x, cheby_coeffs, degree):
    """Pure-JAX reference mirroring the PyTorch forward (tanh -> acos -> *arange -> cos -> einsum)."""
    ar = jnp.arange(degree + 1, dtype=jnp.float32)
    for c in cheby_coeffs:
        theta = jnp.arccos(jnp.tanh(x))                          # [B, D]
        feats = jnp.cos(theta[..., None] * ar)                   # [B, D, deg+1]
        x = jnp.einsum("bid,iod->bo", feats, c)
    return x


if __name__ == "__main__":
    # KACN(layers_hidden=[32, 64, 16], degree=3, dropout=0.0, l1_decay=0.0)
    layers_hidden = [32, 64, 16]
    degree = 3
    batch = 16

    key = jax.random.PRNGKey(0)
    key, kx, kp = jax.random.split(key, 3)
    x = jax.random.normal(kx, (batch, layers_hidden[0]), jnp.float32)
    cheby_coeffs = init_kacn_params(kp, layers_hidden, degree)

    # batch=16 -> two 8-row tiles -> grid=(2,): exercises the pipelined path
    # and the 2-tile requirement for v7x megacore sharding.
    out = kacn_forward(x, cheby_coeffs, degree)
    out = jax.block_until_ready(out)

    ref = kacn_reference(x, cheby_coeffs, degree)
    assert out.shape == (batch, layers_hidden[-1])
    assert out.dtype == x.dtype
    # Tolerance loosened for the bf16 MXU matmul inputs (f32 accumulation).
    np.testing.assert_allclose(np.asarray(out), np.asarray(ref),
                               rtol=3e-2, atol=3e-3)
    print("KERNEL_OK")
</pallas_src>

<mosaic_0001>
module attributes {stable_mosaic.version = 11 : i64} {
  func.func @_kacn_kernel(%arg0: i32, %arg1: memref<8x128xf32, #tpu.memory_space<vmem>>, %arg2: memref<512x128xbf16, #tpu.memory_space<vmem>>, %arg3: memref<512x128xbf16, #tpu.memory_space<vmem>>, %arg4: memref<8x128xf32, #tpu.memory_space<vmem>>) attributes {dimension_semantics = [#tpu.dimension_semantics<parallel>], iteration_bounds = array<i64: 2>, scalar_prefetch = 0 : i64, scratch_operands = 0 : i64, tpu.core_type = #tpu.core_type<tc>, window_params = [{transform_indices = @transform_0, window_bounds = array<i64: 8, 128>}, {pipeline_mode = #tpu.pipeline_mode<synchronous>, transform_indices = @transform_1, window_bounds = array<i64: 512, 128>}, {pipeline_mode = #tpu.pipeline_mode<synchronous>, transform_indices = @transform_2, window_bounds = array<i64: 512, 128>}, {transform_indices = @transform_3, window_bounds = array<i64: 8, 128>}]} {
    %c0 = arith.constant 0 : index
    %c0_0 = arith.constant 0 : index
    %0 = vector.load %arg1[%c0, %c0_0] : memref<8x128xf32, #tpu.memory_space<vmem>>, vector<8x128xf32>
    %1 = math.tanh %0 : vector<8x128xf32>
    %cst = arith.constant 1.000000e+00 : f32
    %2 = vector.broadcast %cst : f32 to vector<8x128xf32>
    %3 = arith.addf %1, %1 : vector<8x128xf32>
    %4 = arith.mulf %3, %1 : vector<8x128xf32>
    %5 = arith.subf %4, %2 : vector<8x128xf32>
    %6 = arith.mulf %3, %5 : vector<8x128xf32>
    %7 = arith.subf %6, %1 : vector<8x128xf32>
    %8 = tpu.concatenate %2, %1, %5, %7 in 1 : vector<8x128xf32>, vector<8x128xf32>, vector<8x128xf32>, vector<8x128xf32> -> vector<8x512xf32>
    %9 = arith.truncf %8 : vector<8x512xf32> to vector<8x512xbf16>
    %c0_1 = arith.constant 0 : index
    %c0_2 = arith.constant 0 : index
    %10 = vector.load %arg2[%c0_1, %c0_2] : memref<512x128xbf16, #tpu.memory_space<vmem>>, vector<512x128xbf16>
    %cst_3 = arith.constant dense<0.000000e+00> : vector<8x128xf32>
    %11 = tpu.matmul %9, %10, %cst_3 {dimension_numbers = #tpu.dot_dimension_numbers<[1], [0], [0], [1], [0, 0, 1, 1], [], []>} : vector<8x512xbf16>, vector<512x128xbf16>, vector<8x128xf32> -> vector<8x128xf32>
    %12 = math.tanh %11 : vector<8x128xf32>
    %cst_4 = arith.constant 1.000000e+00 : f32
    %13 = vector.broadcast %cst_4 : f32 to vector<8x128xf32>
    %14 = arith.addf %12, %12 : vector<8x128xf32>
    %15 = arith.mulf %14, %12 : vector<8x128xf32>
    %16 = arith.subf %15, %13 : vector<8x128xf32>
    %17 = arith.mulf %14, %16 : vector<8x128xf32>
    %18 = arith.subf %17, %12 : vector<8x128xf32>
    %19 = tpu.concatenate %13, %12, %16, %18 in 1 : vector<8x128xf32>, vector<8x128xf32>, vector<8x128xf32>, vector<8x128xf32> -> vector<8x512xf32>
    %20 = arith.truncf %19 : vector<8x512xf32> to vector<8x512xbf16>
    %c0_5 = arith.constant 0 : index
    %c0_6 = arith.constant 0 : index
    %21 = vector.load %arg3[%c0_5, %c0_6] : memref<512x128xbf16, #tpu.memory_space<vmem>>, vector<512x128xbf16>
    %cst_7 = arith.constant dense<0.000000e+00> : vector<8x128xf32>
    %22 = tpu.matmul %20, %21, %cst_7 {dimension_numbers = #tpu.dot_dimension_numbers<[1], [0], [0], [1], [0, 0, 1, 1], [], []>} : vector<8x512xbf16>, vector<512x128xbf16>, vector<8x128xf32> -> vector<8x128xf32>
    %c0_8 = arith.constant 0 : index
    %c0_9 = arith.constant 0 : index
    %23 = vector.load %arg4[%c0_8, %c0_9] : memref<8x128xf32, #tpu.memory_space<vmem>>, vector<8x128xf32>
    tpu.vector_store %arg4[%c0_8, %c0_9], %22 {strides = array<i32>} : memref<8x128xf32, #tpu.memory_space<vmem>>, vector<8x128xf32>,
    return
  }
  func.func @transform_0(%arg0: i32) -> (i32, i32) {
    %c0_i32 = arith.constant 0 : i32
    %c0_i32_0 = arith.constant 0 : i32
    return %arg0, %c0_i32 : i32, i32
  }
  func.func @transform_1(%arg0: i32) -> (i32, i32) {
    %c0_i32 = arith.constant 0 : i32
    %c0_i32_0 = arith.constant 0 : i32
    %c0_i32_1 = arith.constant 0 : i32
    return %c0_i32, %c0_i32_0 : i32, i32
  }
  func.func @transform_2(%arg0: i32) -> (i32, i32) {
    %c0_i32 = arith.constant 0 : i32
    %c0_i32_0 = arith.constant 0 : i32
    %c0_i32_1 = arith.constant 0 : i32
    return %c0_i32, %c0_i32_0 : i32, i32
  }
  func.func @transform_3(%arg0: i32) -> (i32, i32) {
    %c0_i32 = arith.constant 0 : i32
    %c0_i32_0 = arith.constant 0 : i32
    return %arg0, %c0_i32 : i32, i32
  }
}

</mosaic_0001>

<llo_original>
// kernel: tpu_custom_call.1
$region0: #{tpu_custom_call.1}
  #allocation0 [shape = 'u32[]', space=smem, size = 0x4, offset = 0x4, fixed_abs, tag = 'smem constant byte address 0x4 - core index']
  #allocation1 [shape = 'u32[72,128]{1,0:T(1,128)}', space=vmem, size = 0x9000, scoped, tag = 'internal scratch']
  %s0 = inlined_call_operand.hbm [shape: f32[16,128], index: 0, kind: input, shape index: {}]
  %s1 = inlined_call_operand.hbm [shape: bf16[512,128], index: 1, kind: input, shape index: {}]
  %s2 = inlined_call_operand.hbm [shape: bf16[512,128], index: 2, kind: input, shape index: {}]
  %s3 = inlined_call_operand.hbm [shape: f32[16,128], index: 3, kind: output, shape index: {}]
  %s4 = sld [smem:[#allocation0]]
  $region57: #{tpu_custom_call.1} parent=0
    _
  %s6 = ssub.s32 1, %s4
  %s7 = scalar_select 0, %s6, %s4
  $region1: #{tpu_custom_call.1} parent=0
    #allocation2 [shape = 'u8[8192]{0}', space=vmem, size = 0x2000, scoped, tag = 'input window, operand 0']
    #allocation3 [shape = 's32[2]{0}', space=sflag, size = 0x8, scoped, tag = 'scoped memory for tpu_custom_call.1']
    #allocation4 [shape = 's32[2]{0}', space=sflag, size = 0x8, scoped, tag = 'scoped memory for tpu_custom_call.1']
    #allocation5 [shape = 'u8[131072]{0}', space=vmem, size = 0x20000, scoped, tag = 'input window, operand 1, single buffered']
    #allocation6 [shape = 's32[1]{0}', space=sflag, size = 0x4, scoped, tag = 'scoped memory for tpu_custom_call.1']
    #allocation7 [shape = 'u8[131072]{0}', space=vmem, size = 0x20000, scoped, tag = 'input window, operand 2, single buffered']
    #allocation8 [shape = 'u8[8192]{0}', space=vmem, size = 0x2000, scoped, tag = 'output window, operand 0']
    %8 = vsyncpa [#allocation3], 0
    %s9 = scalar_lea.sflag [#allocation3], 1
    %10 = vsyncpa %s9, 0
    %11 = vsyncpa [#allocation6], 0
    %12 = vsyncpa [#allocation4], 0
    %s13 = scalar_lea.sflag [#allocation4], 1
    %14 = vsyncpa %s13, 0
    loop: start=0, step=1, limit=4
    $region2: #{tpu_custom_call.1} parent=1 // loop_pre_header
      _
    $region3: #{tpu_custom_call.1} parent=1 // loop_header
      %s16 = sphi 0, %s20
      %p17 = scmp.ge.s32.totalorder %s16, 4
      %s26 = sphi 0, %s28
      %s29 = sphi 0, %s26
      %s30 = sphi 0, %s29
      %s46 = sphi 0, %s30
      %s50 = sphi 0, %s50
      %s52 = sphi 0, %s50
      %s53 = sphi 0, %s52
      %s67 = sphi 0, %s53
      %s71 = sphi 0, %s71
      %s73 = sphi 0, %s71
      %s74 = sphi 0, %s73
      %s88 = sphi 0, %s74
      %s94 = sphi 0, %s96
      %s97 = sphi 0, %s94
      %s98 = sphi 0, %s97
      %s114 = sphi 0, %s98
    $region4: #{tpu_custom_call.1} parent=1 // loop_header_branch
      %19 = sbr.rel (%p17) target = $region8
    $region5: #{tpu_custom_call.1} parent=1 // loop_body
      %s21 = ssub.s32 %s16, 1
      %s22 = ssub.s32 %s16, 2
      %s23 = sadd.s32 %s16, 1
      %s24 = ssub.s32 %s16, %s23
      %p25 = scmp.eq.s32.totalorder %s24, 0
      %s27 = sadd.s32 %s26, 1
      %s28 = scalar_select %p25, %s26, %s27
      %p31 = pneg %p25
      %p32 = scmp.eq.s32.totalorder %s16, 1
      %p33 = por %p31, %p32
      %p34 = scmp.ne.s32.totalorder %s26, %s29
      %p35 = scmp.eq.s32.totalorder %s16, 0
      %p36 = por %p34, %p35
      %p37 = scmp.ne.s32.totalorder %s26, %s29
      %p38 = scmp.eq.s32.totalorder %s21, 1
      %p39 = por %p37, %p38
      %p40 = scmp.ne.s32.totalorder %s29, %s30
      %p41 = scmp.eq.s32.totalorder %s21, 0
      %p42 = por %p40, %p41
      %p43 = scmp.ne.s32.totalorder %s29, %s30
      %p44 = scmp.eq.s32.totalorder %s22, 1
      %p45 = por %p43, %p44
      %p47 = scmp.ne.s32.totalorder %s30, %s46
      %p48 = scmp.eq.s32.totalorder %s22, 0
      %p49 = por %p47, %p48
      %s51 = sadd.s32 %s50, 1
      %p54 = scmp.eq.s32.totalorder %s16, 1
      %p55 = scmp.ne.s32.totalorder %s50, %s52
      %p56 = scmp.eq.s32.totalorder %s16, 0
      %p57 = por %p55, %p56
      %p58 = scmp.ne.s32.totalorder %s50, %s52
      %p59 = scmp.eq.s32.totalorder %s21, 1
      %p60 = por %p58, %p59
      %p61 = scmp.ne.s32.totalorder %s52, %s53
      %p62 = scmp.eq.s32.totalorder %s21, 0
      %p63 = por %p61, %p62
      %p64 = scmp.ne.s32.totalorder %s52, %s53
      %p65 = scmp.eq.s32.totalorder %s22, 1
      %p66 = por %p64, %p65
      %p68 = scmp.ne.s32.totalorder %s53, %s67
      %p69 = scmp.eq.s32.totalorder %s22, 0
      %p70 = por %p68, %p69
      %s72 = sadd.s32 %s71, 1
      %p75 = scmp.eq.s32.totalorder %s16, 1
      %p76 = scmp.ne.s32.totalorder %s71, %s73
      %p77 = scmp.eq.s32.totalorder %s16, 0
      %p78 = por %p76, %p77
      %p79 = scmp.ne.s32.totalorder %s71, %s73
      %p80 = scmp.eq.s32.totalorder %s21, 1
      %p81 = por %p79, %p80
      %p82 = scmp.ne.s32.totalorder %s73, %s74
      %p83 = scmp.eq.s32.totalorder %s21, 0
      %p84 = por %p82, %p83
      %p85 = scmp.ne.s32.totalorder %s73, %s74
      %p86 = scmp.eq.s32.totalorder %s22, 1
      %p87 = por %p85, %p86
      %p89 = scmp.ne.s32.totalorder %s74, %s88
      %p90 = scmp.eq.s32.totalorder %s22, 0
      %p91 = por %p89, %p90
      %s92 = ssub.s32 %s16, %s23
      %p93 = scmp.eq.s32.totalorder %s92, 0
      %s95 = sadd.s32 %s94, 1
      %s96 = scalar_select %p93, %s94, %s95
      %p99 = pneg %p93
      %p100 = scmp.eq.s32.totalorder %s16, 1
      %p101 = por %p99, %p100
      %p102 = scmp.ne.s32.totalorder %s94, %s97
      %p103 = scmp.eq.s32.totalorder %s16, 0
      %p104 = por %p102, %p103
      %p105 = scmp.ne.s32.totalorder %s94, %s97
      %p106 = scmp.eq.s32.totalorder %s21, 1
      %p107 = por %p105, %p106
      %p108 = scmp.ne.s32.totalorder %s97, %s98
      %p109 = scmp.eq.s32.totalorder %s21, 0
      %p110 = por %p108, %p109
      %p111 = scmp.ne.s32.totalorder %s97, %s98
      %p112 = scmp.eq.s32.totalorder %s22, 1
      %p113 = por %p111, %p112
      %p115 = scmp.ne.s32.totalorder %s98, %s114
      %p116 = scmp.eq.s32.totalorder %s22, 0
      %p117 = por %p115, %p116
      %p118 = scmp.le.s32.totalorder 1, %s16
      %p119 = scmp.lt.s32.totalorder %s16, 3
      %p120 = pnand %p118, %p119
      %p121 = pneg %p120
      // Predicated region
      $region9: #{tpu_custom_call.1} parent=5 // pred_check
        _
      $region10: #{tpu_custom_call.1} parent=5 // pred_check_branch
        %123 = sbr.rel (%p120) target = $region12
      $region11: #{tpu_custom_call.1} parent=5 // pred_region
        %s124 = ssub.s32 %s16, 1
        // Predicated region
        $region13: #{tpu_custom_call.1} parent=11 // pred_check
          %p125 = pneg %p63
        $region14: #{tpu_custom_call.1} parent=11 // pred_check_branch
          %127 = sbr.rel (%p125) target = $region16
        $region15: #{tpu_custom_call.1} parent=11 // pred_region
          %129 = vsyncadd [#allocation6], 0
          %s130 = sshll.u32 %s1, 4
          %s131 = int_to_ptr.hbm [resolvable:$true] %s130
          %s132 = sshll.u32 [#allocation5], 4
          %s133 = int_to_ptr.vmem [resolvable:$true] %s132
          %138 = dma.hbm_to_vmem [thread:$0]  %s131, 4096, %s133, [#allocation6], 64, 64, 4
        $region16: #{tpu_custom_call.1} parent=11 // pred_fallthru
          _
        // Predicated region
        $region17: #{tpu_custom_call.1} parent=11 // pred_check
          %p139 = pneg %p84
        $region18: #{tpu_custom_call.1} parent=11 // pred_check_branch
          %141 = sbr.rel (%p139) target = $region20
        $region19: #{tpu_custom_call.1} parent=11 // pred_region
          %143 = vsyncadd [#allocation6], 0
          %s144 = sshll.u32 %s2, 4
          %s145 = int_to_ptr.hbm [resolvable:$true] %s144
          %s146 = sshll.u32 [#allocation7], 4
          %s147 = int_to_ptr.vmem [resolvable:$true] %s146
          %152 = dma.hbm_to_vmem [thread:$0]  %s145, 4096, %s147, [#allocation6], 64, 64, 4
        $region20: #{tpu_custom_call.1} parent=11 // pred_fallthru
          _
      $region12: #{tpu_custom_call.1} parent=5 // pred_fallthru
        _
      %p153 = scmp.lt.s32.totalorder %s16, 2
      // Predicated region
      $region21: #{tpu_custom_call.1} parent=5 // pred_check
        %p154 = pneg %p153
      $region22: #{tpu_custom_call.1} parent=5 // pred_check_branch
        %156 = sbr.rel (%p154) target = $region24
      $region23: #{tpu_custom_call.1} parent=5 // pred_region
        // Predicated region
        $region25: #{tpu_custom_call.1} parent=23 // pred_check
          %p157 = pneg %p36
        $region26: #{tpu_custom_call.1} parent=23 // pred_check_branch
          %159 = sbr.rel (%p157) target = $region28
        $region27: #{tpu_custom_call.1} parent=23 // pred_region
          %s160 = sand.u32 %s26, 1
          %s161 = scalar_lea.sflag [#allocation3], %s160
          %s162 = sand.u32 %s26, 1
          %s163 = smul.addr %s162, 8
          %s164 = scalar_lea.vmem [#allocation2], %s163
          %166 = vsyncadd %s161, 0
          %s167 = smul.addr %s16, 8
          %s168 = scalar_lea.hbm %s0, %s167
          %s170 = sshll.u32 %s168, 4
          %s171 = int_to_ptr.hbm [resolvable:$true] %s170
          %s172 = sshll.u32 %s164, 4
          %s173 = int_to_ptr.vmem [resolvable:$true] %s172
          %175 = dma.hbm_to_vmem [thread:$0]  %s171, 128, %s173, %s161
        $region28: #{tpu_custom_call.1} parent=23 // pred_fallthru
          _
      $region24: #{tpu_custom_call.1} parent=5 // pred_fallthru
        _
      %p176 = scmp.le.s32.totalorder 1, %s16
      %p177 = scmp.lt.s32.totalorder %s16, 3
      %p178 = pnand %p176, %p177
      %p179 = pneg %p178
      // Predicated region
      $region29: #{tpu_custom_call.1} parent=5 // pred_check
        _
      $region30: #{tpu_custom_call.1} parent=5 // pred_check_branch
        %181 = sbr.rel (%p178) target = $region32
      $region31: #{tpu_custom_call.1} parent=5 // pred_region
        %s182 = ssub.s32 %s16, 1
        %s183 = sand.u32 %s29, 1
        %s184 = scalar_lea.sflag [#allocation3], %s183
        %s185 = sand.u32 %s29, 1
        %s186 = smul.addr %s185, 8
        %s187 = scalar_lea.vmem [#allocation2], %s186
        // Predicated region
        $region33: #{tpu_custom_call.1} parent=31 // pred_check
          %p188 = pneg %p42
        $region34: #{tpu_custom_call.1} parent=31 // pred_check_branch
          %190 = sbr.rel (%p188) target = $region36
        $region35: #{tpu_custom_call.1} parent=31 // pred_region
          %192 = dma.done %s184, 128
        $region36: #{tpu_custom_call.1} parent=31 // pred_fallthru
          _
        // Predicated region
        $region37: #{tpu_custom_call.1} parent=31 // pred_check
          %p193 = pneg %p63
        $region38: #{tpu_custom_call.1} parent=31 // pred_check_branch
          %195 = sbr.rel (%p193) target = $region40
        $region39: #{tpu_custom_call.1} parent=31 // pred_region
          %197 = dma.done [#allocation6], 4096
        $region40: #{tpu_custom_call.1} parent=31 // pred_fallthru
          _
        // Predicated region
        $region41: #{tpu_custom_call.1} parent=31 // pred_check
          %p198 = pneg %p84
        $region42: #{tpu_custom_call.1} parent=31 // pred_check_branch
          %200 = sbr.rel (%p198) target = $region44
        $region43: #{tpu_custom_call.1} parent=31 // pred_region
          %202 = dma.done [#allocation6], 4096
        $region44: #{tpu_custom_call.1} parent=31 // pred_fallthru
          _
        %s203 = sand.u32 %s29, 1
        %s204 = scalar_lea.sflag [#allocation3], %s203
        %s205 = sand.u32 %s29, 1
        %s206 = smul.addr %s205, 8
        %s207 = scalar_lea.vmem [#allocation2], %s206
        %p208 = pneg %p42
        %p209 = pneg %p39
        %p210 = pneg %p63
        %p211 = pneg %p60
        %p212 = pneg %p84
        %p213 = pneg %p81
        %p214 = pneg %p110
        %p215 = pneg %p107
        %s216 = sand.u32 %s97, 1
        %s217 = scalar_lea.sflag [#allocation4], %s216
        %s218 = sand.u32 %s97, 1
        %s219 = smul.addr %s218, 8
        %s220 = scalar_lea.vmem [#allocation8], %s219
        %v221 = vld [vmem:[%s187] sm:$0xff]
        %v222 = vtanh.pop %v221
        %v223 = vadd.f32 %v222, %v222
        %v224 = vmul.f32 %v223, %v222
        %v225 = vsub.f32 %v224, 1.0
        %v226 = vmul.f32 %v223, %v225
        %v227 = vsub.f32 %v226, %v222
        %v228 = vpack.c.bf16 1.0, 1.0
        %v229 = vpack.c.bf16 %v222, %v222
        %v230 = vpack.c.bf16 %v225, %v225
        %v231 = vpack.c.bf16 %v227, %v227
        %v232 = vld [vmem:[#allocation5] sm:$0xf]
        %v233 = vld [vmem:[#allocation5 + $0x4] sm:$0xf]
        %v234 = vld [vmem:[#allocation5 + $0x8] sm:$0xf]
        %v235 = vld [vmem:[#allocation5 + $0xc] sm:$0xf]
        %v236 = vld [vmem:[#allocation5 + $0x10] sm:$0xf]
        %v237 = vld [vmem:[#allocation5 + $0x14] sm:$0xf]
        %v238 = vld [vmem:[#allocation5 + $0x18] sm:$0xf]
        %v239 = vld [vmem:[#allocation5 + $0x1c] sm:$0xf]
        %v240 = vld [vmem:[#allocation5 + $0x20] sm:$0xf]
        %v241 = vld [vmem:[#allocation5 + $0x24] sm:$0xf]
        %v242 = vld [vmem:[#allocation5 + $0x28] sm:$0xf]
        %v243 = vld [vmem:[#allocation5 + $0x2c] sm:$0xf]
        %v244 = vld [vmem:[#allocation5 + $0x30] sm:$0xf]
        %v245 = vld [vmem:[#allocation5 + $0x34] sm:$0xf]
        %v246 = vld [vmem:[#allocation5 + $0x38] sm:$0xf]
        %v247 = vld [vmem:[#allocation5 + $0x3c] sm:$0xf]
        %v248 = vld [vmem:[#allocation5 + $0x40] sm:$0xf]
        %v249 = vld [vmem:[#allocation5 + $0x44] sm:$0xf]
        %v250 = vld [vmem:[#allocation5 + $0x48] sm:$0xf]
        %v251 = vld [vmem:[#allocation5 + $0x4c] sm:$0xf]
        %v252 = vld [vmem:[#allocation5 + $0x50] sm:$0xf]
        %v253 = vld [vmem:[#allocation5 + $0x54] sm:$0xf]
        %v254 = vld [vmem:[#allocation5 + $0x58] sm:$0xf]
        %v255 = vld [vmem:[#allocation5 + $0x5c] sm:$0xf]
        %v256 = vld [vmem:[#allocation5 + $0x60] sm:$0xf]
        %v257 = vld [vmem:[#allocation5 + $0x64] sm:$0xf]
        %v258 = vld [vmem:[#allocation5 + $0x68] sm:$0xf]
        %v259 = vld [vmem:[#allocation5 + $0x6c] sm:$0xf]
        %v260 = vld [vmem:[#allocation5 + $0x70] sm:$0xf]
        %v261 = vld [vmem:[#allocation5 + $0x74] sm:$0xf]
        %v262 = vld [vmem:[#allocation5 + $0x78] sm:$0xf]
        %v263 = vld [vmem:[#allocation5 + $0x7c] sm:$0xf]
        %v264 = vld [vmem:[#allocation5 + $0x80] sm:$0xf]
        %v265 = vld [vmem:[#allocation5 + $0x84] sm:$0xf]
        %v266 = vld [vmem:[#allocation5 + $0x88] sm:$0xf]
        %v267 = vld [vmem:[#allocation5 + $0x8c] sm:$0xf]
        %v268 = vld [vmem:[#allocation5 + $0x90] sm:$0xf]
        %v269 = vld [vmem:[#allocation5 + $0x94] sm:$0xf]
        %v270 = vld [vmem:[#allocation5 + $0x98] sm:$0xf]
        %v271 = vld [vmem:[#allocation5 + $0x9c] sm:$0xf]
        %v272 = vld [vmem:[#allocation5 + $0xa0] sm:$0xf]
        %v273 = vld [vmem:[#allocation5 + $0xa4] sm:$0xf]
        %v274 = vld [vmem:[#allocation5 + $0xa8] sm:$0xf]
        %v275 = vld [vmem:[#allocation5 + $0xac] sm:$0xf]
        %v276 = vld [vmem:[#allocation5 + $0xb0] sm:$0xf]
        %v277 = vld [vmem:[#allocation5 + $0xb4] sm:$0xf]
        %v278 = vld [vmem:[#allocation5 + $0xb8] sm:$0xf]
        %v279 = vld [vmem:[#allocation5 + $0xbc] sm:$0xf]
        %v280 = vld [vmem:[#allocation5 + $0xc0] sm:$0xf]
        %v281 = vld [vmem:[#allocation5 + $0xc4] sm:$0xf]
        %v282 = vld [vmem:[#allocation5 + $0xc8] sm:$0xf]
        %v283 = vld [vmem:[#allocation5 + $0xcc] sm:$0xf]
        %v284 = vld [vmem:[#allocation5 + $0xd0] sm:$0xf]
        %v285 = vld [vmem:[#allocation5 + $0xd4] sm:$0xf]
        %v286 = vld [vmem:[#allocation5 + $0xd8] sm:$0xf]
        %v287 = vld [vmem:[#allocation5 + $0xdc] sm:$0xf]
        %v288 = vld [vmem:[#allocation5 + $0xe0] sm:$0xf]
        %v289 = vld [vmem:[#allocation5 + $0xe4] sm:$0xf]
        %v290 = vld [vmem:[#allocation5 + $0xe8] sm:$0xf]
        %v291 = vld [vmem:[#allocation5 + $0xec] sm:$0xf]
        %v292 = vld [vmem:[#allocation5 + $0xf0] sm:$0xf]
        %v293 = vld [vmem:[#allocation5 + $0xf4] sm:$0xf]
        %v294 = vld [vmem:[#allocation5 + $0xf8] sm:$0xf]
        %v295 = vld [vmem:[#allocation5 + $0xfc] sm:$0xf]
        %v360 = vunpack.c.l.b16 %v232
        %v361 = vunpack.c.l.b16 %v233
        %v362 = vunpack.c.l.b16 %v234
        %v363 = vunpack.c.l.b16 %v235
        %v364 = vunpack.c.l.b16 %v236
        %v365 = vunpack.c.l.b16 %v237
        %v366 = vunpack.c.l.b16 %v238
        %v367 = vunpack.c.l.b16 %v239
        %v368 = vunpack.c.l.b16 %v240
        %v369 = vunpack.c.l.b16 %v241
        %v370 = vunpack.c.l.b16 %v242
        %v371 = vunpack.c.l.b16 %v243
        %v372 = vunpack.c.l.b16 %v244
        %v373 = vunpack.c.l.b16 %v245
        %v374 = vunpack.c.l.b16 %v246
        %v375 = vunpack.c.l.b16 %v247
        %v376 = vunpack.c.l.b16 %v248
        %v377 = vunpack.c.l.b16 %v249
        %v378 = vunpack.c.l.b16 %v250
        %v379 = vunpack.c.l.b16 %v251
        %v380 = vunpack.c.l.b16 %v252
        %v381 = vunpack.c.l.b16 %v253
        %v382 = vunpack.c.l.b16 %v254
        %v383 = vunpack.c.l.b16 %v255
        %v384 = vunpack.c.l.b16 %v256
        %v385 = vunpack.c.l.b16 %v257
        %v386 = vunpack.c.l.b16 %v258
        %v387 = vunpack.c.l.b16 %v259
        %v388 = vunpack.c.l.b16 %v260
        %v389 = vunpack.c.l.b16 %v261
        %v390 = vunpack.c.l.b16 %v262
        %v391 = vunpack.c.l.b16 %v263
        %v392 = vunpack.c.l.b16 %v264
        %v393 = vunpack.c.l.b16 %v265
        %v394 = vunpack.c.l.b16 %v266
        %v395 = vunpack.c.l.b16 %v267
        %v396 = vunpack.c.l.b16 %v268
        %v397 = vunpack.c.l.b16 %v269
        %v398 = vunpack.c.l.b16 %v270
        %v399 = vunpack.c.l.b16 %v271
        %v400 = vunpack.c.l.b16 %v272
        %v401 = vunpack.c.l.b16 %v273
        %v402 = vunpack.c.l.b16 %v274
        %v403 = vunpack.c.l.b16 %v275
        %v404 = vunpack.c.l.b16 %v276
        %v405 = vunpack.c.l.b16 %v277
        %v406 = vunpack.c.l.b16 %v278
        %v407 = vunpack.c.l.b16 %v279
        %v408 = vunpack.c.l.b16 %v280
        %v409 = vunpack.c.l.b16 %v281
        %v410 = vunpack.c.l.b16 %v282
        %v411 = vunpack.c.l.b16 %v283
        %v412 = vunpack.c.l.b16 %v284
        %v413 = vunpack.c.l.b16 %v285
        %v414 = vunpack.c.l.b16 %v286
        %v415 = vunpack.c.l.b16 %v287
        %v416 = vunpack.c.l.b16 %v288
        %v417 = vunpack.c.l.b16 %v289
        %v418 = vunpack.c.l.b16 %v290
        %v419 = vunpack.c.l.b16 %v291
        %v420 = vunpack.c.l.b16 %v292
        %v421 = vunpack.c.l.b16 %v293
        %v422 = vunpack.c.l.b16 %v294
        %v423 = vunpack.c.l.b16 %v295
        %v424 = vpack.c.b16 %v361, %v360
        %v425 = vpack.c.b16 %v363, %v362
        %v426 = vpack.c.b16 %v365, %v364
        %v427 = vpack.c.b16 %v367, %v366
        %v428 = vpack.c.b16 %v369, %v368
        %v429 = vpack.c.b16 %v371, %v370
        %v430 = vpack.c.b16 %v373, %v372
        %v431 = vpack.c.b16 %v375, %v374
        %v432 = vpack.c.b16 %v377, %v376
        %v433 = vpack.c.b16 %v379, %v378
        %v434 = vpack.c.b16 %v381, %v380
        %v435 = vpack.c.b16 %v383, %v382
        %v436 = vpack.c.b16 %v385, %v384
        %v437 = vpack.c.b16 %v387, %v386
        %v438 = vpack.c.b16 %v389, %v388
        %v439 = vpack.c.b16 %v391, %v390
        %v440 = vpack.c.b16 %v393, %v392
        %v441 = vpack.c.b16 %v395, %v394
        %v442 = vpack.c.b16 %v397, %v396
        %v443 = vpack.c.b16 %v399, %v398
        %v444 = vpack.c.b16 %v401, %v400
        %v445 = vpack.c.b16 %v403, %v402
        %v446 = vpack.c.b16 %v405, %v404
        %v447 = vpack.c.b16 %v407, %v406
        %v448 = vpack.c.b16 %v409, %v408
        %v449 = vpack.c.b16 %v411, %v410
        %v450 = vpack.c.b16 %v413, %v412
        %v451 = vpack.c.b16 %v415, %v414
        %v452 = vpack.c.b16 %v417, %v416
        %v453 = vpack.c.b16 %v419, %v418
        %v454 = vpack.c.b16 %v421, %v420
        %v455 = vpack.c.b16 %v423, %v422
        %488 = vmatpush.bf16.msra.mxu0 %v431
        %489 = vmatpush.bf16.msra.mxu0 %v430
        %490 = vmatpush.bf16.msra.mxu0 %v429
        %491 = vmatpush.bf16.msra.mxu0 %v428
        %492 = vmatpush.bf16.msra.mxu0 %v427
        %493 = vmatpush.bf16.msra.mxu0 %v426
        %494 = vmatpush.bf16.msra.mxu0 %v425
        %495 = vmatpush.bf16.msra.mxu0 %v424
        %496 = vmatmul.bf16.gmra.mxu0 %v228
        %v497 = vpop.f32.mrf.mxu0
        %v498 = vadd.f32 0.0, %v497
        %v499 = vpop.f32.mrf.mxu0
        %500 = vdwg.mxu0
        %501 = vmatpush.bf16.msra.mxu0 %v439
        %502 = vmatpush.bf16.msra.mxu0 %v438
        %503 = vmatpush.bf16.msra.mxu0 %v437
        %504 = vmatpush.bf16.msra.mxu0 %v436
        %505 = vmatpush.bf16.msra.mxu0 %v435
        %506 = vmatpush.bf16.msra.mxu0 %v434
        %507 = vmatpush.bf16.msra.mxu0 %v433
        %508 = vmatpush.bf16.msra.mxu0 %v432
        %509 = vmatmul.bf16.gmra.mxu0 %v229
        %v510 = vpop.f32.mrf.mxu0
        %v511 = vadd.f32 %v498, %v510
        %v512 = vpop.f32.mrf.mxu0
        %513 = vdwg.mxu0
        %514 = vmatpush.bf16.msra.mxu0 %v447
        %515 = vmatpush.bf16.msra.mxu0 %v446
        %516 = vmatpush.bf16.msra.mxu0 %v445
        %517 = vmatpush.bf16.msra.mxu0 %v444
        %518 = vmatpush.bf16.msra.mxu0 %v443
        %519 = vmatpush.bf16.msra.mxu0 %v442
        %520 = vmatpush.bf16.msra.mxu0 %v441
        %521 = vmatpush.bf16.msra.mxu0 %v440
        %522 = vmatmul.bf16.gmra.mxu0 %v230
        %v523 = vpop.f32.mrf.mxu0
        %v524 = vadd.f32 %v511, %v523
        %v525 = vpop.f32.mrf.mxu0
        %526 = vdwg.mxu0
        %527 = vmatpush.bf16.msra.mxu0 %v455
        %528 = vmatpush.bf16.msra.mxu0 %v454
        %529 = vmatpush.bf16.msra.mxu0 %v453
        %530 = vmatpush.bf16.msra.mxu0 %v452
        %531 = vmatpush.bf16.msra.mxu0 %v451
        %532 = vmatpush.bf16.msra.mxu0 %v450
        %533 = vmatpush.bf16.msra.mxu0 %v449
        %534 = vmatpush.bf16.msra.mxu0 %v448
        %535 = vmatmul.bf16.gmra.mxu0 %v231
        %v536 = vpop.f32.mrf.mxu0
        %v537 = vadd.f32 %v524, %v536
        %v538 = vpop.f32.mrf.mxu0
        %539 = vdwg.mxu0
        %v540 = vtanh.pop %v537
        %v541 = vadd.f32 %v540, %v540
        %v542 = vmul.f32 %v541, %v540
        %v543 = vsub.f32 %v542, 1.0
        %v544 = vmul.f32 %v541, %v543
        %v545 = vsub.f32 %v544, %v540
        %v546 = vpack.c.bf16 %v540, %v540
        %v547 = vpack.c.bf16 %v543, %v543
        %v548 = vpack.c.bf16 %v545, %v545
        %v549 = vld [vmem:[#allocation7] sm:$0xf]
        %v550 = vld [vmem:[#allocation7 + $0x4] sm:$0xf]
        %v551 = vld [vmem:[#allocation7 + $0x8] sm:$0xf]
        %v552 = vld [vmem:[#allocation7 + $0xc] sm:$0xf]
        %v553 = vld [vmem:[#allocation7 + $0x10] sm:$0xf]
        %v554 = vld [vmem:[#allocation7 + $0x14] sm:$0xf]
        %v555 = vld [vmem:[#allocation7 + $0x18] sm:$0xf]
        %v556 = vld [vmem:[#allocation7 + $0x1c] sm:$0xf]
        %v557 = vld [vmem:[#allocation7 + $0x20] sm:$0xf]
        %v558 = vld [vmem:[#allocation7 + $0x24] sm:$0xf]
        %v559 = vld [vmem:[#allocation7 + $0x28] sm:$0xf]
        %v560 = vld [vmem:[#allocation7 + $0x2c] sm:$0xf]
        %v561 = vld [vmem:[#allocation7 + $0x30] sm:$0xf]
        %v562 = vld [vmem:[#allocation7 + $0x34] sm:$0xf]
        %v563 = vld [vmem:[#allocation7 + $0x38] sm:$0xf]
        %v564 = vld [vmem:[#allocation7 + $0x3c] sm:$0xf]
        %v565 = vld [vmem:[#allocation7 + $0x40] sm:$0xf]
        %v566 = vld [vmem:[#allocation7 + $0x44] sm:$0xf]
        %v567 = vld [vmem:[#allocation7 + $0x48] sm:$0xf]
        %v568 = vld [vmem:[#allocation7 + $0x4c] sm:$0xf]
        %v569 = vld [vmem:[#allocation7 + $0x50] sm:$0xf]
        %v570 = vld [vmem:[#allocation7 + $0x54] sm:$0xf]
        %v571 = vld [vmem:[#allocation7 + $0x58] sm:$0xf]
        %v572 = vld [vmem:[#allocation7 + $0x5c] sm:$0xf]
        %v573 = vld [vmem:[#allocation7 + $0x60] sm:$0xf]
        %v574 = vld [vmem:[#allocation7 + $0x64] sm:$0xf]
        %v575 = vld [vmem:[#allocation7 + $0x68] sm:$0xf]
        %v576 = vld [vmem:[#allocation7 + $0x6c] sm:$0xf]
        %v577 = vld [vmem:[#allocation7 + $0x70] sm:$0xf]
        %v578 = vld [vmem:[#allocation7 + $0x74] sm:$0xf]
        %v579 = vld [vmem:[#allocation7 + $0x78] sm:$0xf]
        %v580 = vld [vmem:[#allocation7 + $0x7c] sm:$0xf]
        %v581 = vld [vmem:[#allocation7 + $0x80] sm:$0xf]
        %v582 = vld [vmem:[#allocation7 + $0x84] sm:$0xf]
        %v583 = vld [vmem:[#allocation7 + $0x88] sm:$0xf]
        %v584 = vld [vmem:[#allocation7 + $0x8c] sm:$0xf]
        %v585 = vld [vmem:[#allocation7 + $0x90] sm:$0xf]
        %v586 = vld [vmem:[#allocation7 + $0x94] sm:$0xf]
        %v587 = vld [vmem:[#allocation7 + $0x98] sm:$0xf]
        %v588 = vld [vmem:[#allocation7 + $0x9c] sm:$0xf]
        %v589 = vld [vmem:[#allocation7 + $0xa0] sm:$0xf]
        %v590 = vld [vmem:[#allocation7 + $0xa4] sm:$0xf]
        %v591 = vld [vmem:[#allocation7 + $0xa8] sm:$0xf]
        %v592 = vld [vmem:[#allocation7 + $0xac] sm:$0xf]
        %v593 = vld [vmem:[#allocation7 + $0xb0] sm:$0xf]
        %v594 = vld [vmem:[#allocation7 + $0xb4] sm:$0xf]
        %v595 = vld [vmem:[#allocation7 + $0xb8] sm:$0xf]
        %v596 = vld [vmem:[#allocation7 + $0xbc] sm:$0xf]
        %v597 = vld [vmem:[#allocation7 + $0xc0] sm:$0xf]
        %v598 = vld [vmem:[#allocation7 + $0xc4] sm:$0xf]
        %v599 = vld [vmem:[#allocation7 + $0xc8] sm:$0xf]
        %v600 = vld [vmem:[#allocation7 + $0xcc] sm:$0xf]
        %v601 = vld [vmem:[#allocation7 + $0xd0] sm:$0xf]
        %v602 = vld [vmem:[#allocation7 + $0xd4] sm:$0xf]
        %v603 = vld [vmem:[#allocation7 + $0xd8] sm:$0xf]
        %v604 = vld [vmem:[#allocation7 + $0xdc] sm:$0xf]
        %v605 = vld [vmem:[#allocation7 + $0xe0] sm:$0xf]
        %v606 = vld [vmem:[#allocation7 + $0xe4] sm:$0xf]
        %v607 = vld [vmem:[#allocation7 + $0xe8] sm:$0xf]
        %v608 = vld [vmem:[#allocation7 + $0xec] sm:$0xf]
        %v609 = vld [vmem:[#allocation7 + $0xf0] sm:$0xf]
        %v610 = vld [vmem:[#allocation7 + $0xf4] sm:$0xf]
        %v611 = vld [vmem:[#allocation7 + $0xf8] sm:$0xf]
        %v612 = vld [vmem:[#allocation7 + $0xfc] sm:$0xf]
        %v677 = vunpack.c.l.b16 %v549
        %v678 = vunpack.c.l.b16 %v550
        %v679 = vunpack.c.l.b16 %v551
        %v680 = vunpack.c.l.b16 %v552
        %v681 = vunpack.c.l.b16 %v553
        %v682 = vunpack.c.l.b16 %v554
        %v683 = vunpack.c.l.b16 %v555
        %v684 = vunpack.c.l.b16 %v556
        %v685 = vunpack.c.l.b16 %v557
        %v686 = vunpack.c.l.b16 %v558
        %v687 = vunpack.c.l.b16 %v559
        %v688 = vunpack.c.l.b16 %v560
        %v689 = vunpack.c.l.b16 %v561
        %v690 = vunpack.c.l.b16 %v562
        %v691 = vunpack.c.l.b16 %v563
        %v692 = vunpack.c.l.b16 %v564
        %v693 = vunpack.c.l.b16 %v565
        %v694 = vunpack.c.l.b16 %v566
        %v695 = vunpack.c.l.b16 %v567
        %v696 = vunpack.c.l.b16 %v568
        %v697 = vunpack.c.l.b16 %v569
        %v698 = vunpack.c.l.b16 %v570
        %v699 = vunpack.c.l.b16 %v571
        %v700 = vunpack.c.l.b16 %v572
        %v701 = vunpack.c.l.b16 %v573
        %v702 = vunpack.c.l.b16 %v574
        %v703 = vunpack.c.l.b16 %v575
        %v704 = vunpack.c.l.b16 %v576
        %v705 = vunpack.c.l.b16 %v577
        %v706 = vunpack.c.l.b16 %v578
        %v707 = vunpack.c.l.b16 %v579
        %v708 = vunpack.c.l.b16 %v580
        %v709 = vunpack.c.l.b16 %v581
        %v710 = vunpack.c.l.b16 %v582
        %v711 = vunpack.c.l.b16 %v583
        %v712 = vunpack.c.l.b16 %v584
        %v713 = vunpack.c.l.b16 %v585
        %v714 = vunpack.c.l.b16 %v586
        %v715 = vunpack.c.l.b16 %v587
        %v716 = vunpack.c.l.b16 %v588
        %v717 = vunpack.c.l.b16 %v589
        %v718 = vunpack.c.l.b16 %v590
        %v719 = vunpack.c.l.b16 %v591
        %v720 = vunpack.c.l.b16 %v592
        %v721 = vunpack.c.l.b16 %v593
        %v722 = vunpack.c.l.b16 %v594
        %v723 = vunpack.c.l.b16 %v595
        %v724 = vunpack.c.l.b16 %v596
        %v725 = vunpack.c.l.b16 %v597
        %v726 = vunpack.c.l.b16 %v598
        %v727 = vunpack.c.l.b16 %v599
        %v728 = vunpack.c.l.b16 %v600
        %v729 = vunpack.c.l.b16 %v601
        %v730 = vunpack.c.l.b16 %v602
        %v731 = vunpack.c.l.b16 %v603
        %v732 = vunpack.c.l.b16 %v604
        %v733 = vunpack.c.l.b16 %v605
        %v734 = vunpack.c.l.b16 %v606
        %v735 = vunpack.c.l.b16 %v607
        %v736 = vunpack.c.l.b16 %v608
        %v737 = vunpack.c.l.b16 %v609
        %v738 = vunpack.c.l.b16 %v610
        %v739 = vunpack.c.l.b16 %v611
        %v740 = vunpack.c.l.b16 %v612
        %v741 = vpack.c.b16 %v678, %v677
        %v742 = vpack.c.b16 %v680, %v679
        %v743 = vpack.c.b16 %v682, %v681
        %v744 = vpack.c.b16 %v684, %v683
        %v745 = vpack.c.b16 %v686, %v685
        %v746 = vpack.c.b16 %v688, %v687
        %v747 = vpack.c.b16 %v690, %v689
        %v748 = vpack.c.b16 %v692, %v691
        %v749 = vpack.c.b16 %v694, %v693
        %v750 = vpack.c.b16 %v696, %v695
        %v751 = vpack.c.b16 %v698, %v697
        %v752 = vpack.c.b16 %v700, %v699
        %v753 = vpack.c.b16 %v702, %v701
        %v754 = vpack.c.b16 %v704, %v703
        %v755 = vpack.c.b16 %v706, %v705
        %v756 = vpack.c.b16 %v708, %v707
        %v757 = vpack.c.b16 %v710, %v709
        %v758 = vpack.c.b16 %v712, %v711
        %v759 = vpack.c.b16 %v714, %v713
        %v760 = vpack.c.b16 %v716, %v715
        %v761 = vpack.c.b16 %v718, %v717
        %v762 = vpack.c.b16 %v720, %v719
        %v763 = vpack.c.b16 %v722, %v721
        %v764 = vpack.c.b16 %v724, %v723
        %v765 = vpack.c.b16 %v726, %v725
        %v766 = vpack.c.b16 %v728, %v727
        %v767 = vpack.c.b16 %v730, %v729
        %v768 = vpack.c.b16 %v732, %v731
        %v769 = vpack.c.b16 %v734, %v733
        %v770 = vpack.c.b16 %v736, %v735
        %v771 = vpack.c.b16 %v738, %v737
        %v772 = vpack.c.b16 %v740, %v739
        %805 = vmatpush.bf16.msra.mxu0 %v748
        %806 = vmatpush.bf16.msra.mxu0 %v747
        %807 = vmatpush.bf16.msra.mxu0 %v746
        %808 = vmatpush.bf16.msra.mxu0 %v745
        %809 = vmatpush.bf16.msra.mxu0 %v744
        %810 = vmatpush.bf16.msra.mxu0 %v743
        %811 = vmatpush.bf16.msra.mxu0 %v742
        %812 = vmatpush.bf16.msra.mxu0 %v741
        %813 = vmatmul.bf16.gmra.mxu0 %v228
        %v814 = vpop.f32.mrf.mxu0
        %v815 = vadd.f32 0.0, %v814
        %v816 = vpop.f32.mrf.mxu0
        %817 = vdwg.mxu0
        %818 = vmatpush.bf16.msra.mxu0 %v756
        %819 = vmatpush.bf16.msra.mxu0 %v755
        %820 = vmatpush.bf16.msra.mxu0 %v754
        %821 = vmatpush.bf16.msra.mxu0 %v753
        %822 = vmatpush.bf16.msra.mxu0 %v752
        %823 = vmatpush.bf16.msra.mxu0 %v751
        %824 = vmatpush.bf16.msra.mxu0 %v750
        %825 = vmatpush.bf16.msra.mxu0 %v749
        %826 = vmatmul.bf16.gmra.mxu0 %v546
        %v827 = vpop.f32.mrf.mxu0
        %v828 = vadd.f32 %v815, %v827
        %v829 = vpop.f32.mrf.mxu0
        %830 = vdwg.mxu0
        %831 = vmatpush.bf16.msra.mxu0 %v764
        %832 = vmatpush.bf16.msra.mxu0 %v763
        %833 = vmatpush.bf16.msra.mxu0 %v762
        %834 = vmatpush.bf16.msra.mxu0 %v761
        %835 = vmatpush.bf16.msra.mxu0 %v760
        %836 = vmatpush.bf16.msra.mxu0 %v759
        %837 = vmatpush.bf16.msra.mxu0 %v758
        %838 = vmatpush.bf16.msra.mxu0 %v757
        %839 = vmatmul.bf16.gmra.mxu0 %v547
        %v840 = vpop.f32.mrf.mxu0
        %v841 = vadd.f32 %v828, %v840
        %v842 = vpop.f32.mrf.mxu0
        %843 = vdwg.mxu0
        %844 = vmatpush.bf16.msra.mxu0 %v772
        %845 = vmatpush.bf16.msra.mxu0 %v771
        %846 = vmatpush.bf16.msra.mxu0 %v770
        %847 = vmatpush.bf16.msra.mxu0 %v769
        %848 = vmatpush.bf16.msra.mxu0 %v768
        %849 = vmatpush.bf16.msra.mxu0 %v767
        %850 = vmatpush.bf16.msra.mxu0 %v766
        %851 = vmatpush.bf16.msra.mxu0 %v765
        %852 = vmatmul.bf16.gmra.mxu0 %v548
        %v853 = vpop.f32.mrf.mxu0
        %v854 = vadd.f32 %v841, %v853
        %v855 = vpop.f32.mrf.mxu0
        %856 = vdwg.mxu0
        %857 = vst [vmem:[%s220] sm:$0xff] %v854
        %s858 = sand.u32 %s97, 1
        %s859 = scalar_lea.sflag [#allocation4], %s858
        %s860 = sand.u32 %s97, 1
        %s861 = smul.addr %s860, 8
        %s862 = scalar_lea.vmem [#allocation8], %s861
        // Predicated region
        $region45: #{tpu_custom_call.1} parent=31 // pred_check
          %p863 = pneg %p107
        $region46: #{tpu_custom_call.1} parent=31 // pred_check_branch
          %865 = sbr.rel (%p863) target = $region48
        $region47: #{tpu_custom_call.1} parent=31 // pred_region
          %867 = vsyncadd %s859, 0
          %s868 = smul.addr %s21, 8
          %s869 = scalar_lea.hbm %s3, %s868
          %s871 = sshll.u32 %s862, 4
          %s872 = int_to_ptr.vmem [resolvable:$true] %s871
          %s873 = sshll.u32 %s869, 4
          %s874 = int_to_ptr.hbm [resolvable:$true] %s873
          %876 = dma.vmem_to_hbm [thread:$0]  %s872, 128, %s874, %s859
        $region48: #{tpu_custom_call.1} parent=31 // pred_fallthru
          _
      $region32: #{tpu_custom_call.1} parent=5 // pred_fallthru
        _
      %p877 = scmp.le.s32.totalorder 2, %s16
      // Predicated region
      $region49: #{tpu_custom_call.1} parent=5 // pred_check
        %p878 = pneg %p877
      $region50: #{tpu_custom_call.1} parent=5 // pred_check_branch
        %880 = sbr.rel (%p878) target = $region52
      $region51: #{tpu_custom_call.1} parent=5 // pred_region
        %s881 = ssub.s32 %s16, 2
        // Predicated region
        $region53: #{tpu_custom_call.1} parent=51 // pred_check
          %p882 = pneg %p113
        $region54: #{tpu_custom_call.1} parent=51 // pred_check_branch
          %884 = sbr.rel (%p882) target = $region56
        $region55: #{tpu_custom_call.1} parent=51 // pred_region
          %s885 = sand.u32 %s98, 1
          %s886 = scalar_lea.sflag [#allocation4], %s885
          %s887 = sand.u32 %s98, 1
          %s888 = smul.addr %s887, 8
          %s889 = scalar_lea.vmem [#allocation8], %s888
          %891 = dma.done %s886, 128
        $region56: #{tpu_custom_call.1} parent=51 // pred_fallthru
          _
      $region52: #{tpu_custom_call.1} parent=5 // pred_fallthru
        _
    $region6: #{tpu_custom_call.1} parent=1 // loop_footer
      %s20 = sadd.s32 1, %s16
    $region7: #{tpu_custom_call.1} parent=1 // loop_footer_branch
      %15 = sbr.rel target = $region3
    $region8: #{tpu_custom_call.1} parent=1 // loop_exit
      _
    %892 = vsyncpa [#allocation3], 1
    %s893 = scalar_lea.sflag [#allocation3], 1
    %894 = vsyncpa %s893, 1
    %895 = vsyncpa [#allocation6], 1
    %896 = vsyncpa [#allocation4], 1
    %s897 = scalar_lea.sflag [#allocation4], 1
    %898 = vsyncpa %s897, 1

</llo_original>
